<compile_context>
chip_gen: v7x
topology: tpu7x:2x2x1
jax: 0.10.0
libtpu: 0.0.40
codegen_flags: <defaults>
</compile_context>

<pallas_src>
import jax
import jax.numpy as jnp
from jax.experimental import pallas as pl
from jax.experimental.pallas import tpu as pltpu


def _round_up(n, m):
    return pl.cdiv(n, m) * m


def composed_potential_kernel(x_ref, w1_ref, b1_ref, wf_ref, pbf_ref,
                              p2_ref, pb2_ref, out_ref):
    f32 = jnp.float32
    # layer 1: affine normalization already folded into W1'/b1'
    h1 = jnp.tanh(
        jnp.dot(x_ref[...], w1_ref[...], preferred_element_type=f32)
        + b1_ref[...])
    # layer 2: W2@P1 fused; goal latent folded into pbf
    h2 = jnp.tanh(
        jnp.dot(h1.astype(wf_ref.dtype), wf_ref[...],
                preferred_element_type=f32)
        + pbf_ref[...])
    # layer 3: narrow potential head (only column 0 carries data)
    out_ref[...] = (
        jnp.dot(h2.astype(p2_ref.dtype), p2_ref[...],
                preferred_element_type=f32)
        + pb2_ref[...])


def prepare_weights(params, goal, compute_dtype=jnp.bfloat16):
    """Fold norm/goal/back-to-back linears and lane-pad.  Call ONCE per
    (params, goal); the result is reused by every composed_potential_forward
    call so no fusion/padding ops run on the hot path."""
    s, bi = params["scaling"], params["bias"]
    W1, b1 = params["W1"], params["b1"]
    W2, b2 = params["W2"], params["b2"]
    P1, pb1 = params["P1"], params["pb1"]
    P2, pb2 = params["P2"], params["pb2"]
    D, H = W1.shape

    # ---- algebraic fusion (batch-independent, done in f32) ----
    W1p = s.T * W1                                          # diag(scaling) @ W1
    b1p = bi @ W1 + b1                                      # (1, H)
    Wf = W2 @ P1                                            # (H, H)
    zg = jnp.tanh((goal * s + bi) @ W1 + b1) @ W2 + b2      # goal latent (1, D)
    pbf = pb1 + (b2 - zg) @ P1                              # (1, H)

    # ---- lane padding: only the H axis; x/D stays unpadded ----
    Hp = _round_up(H, 128)
    OUT = 8                                                 # narrow output slab
    f32, cd = jnp.float32, compute_dtype

    prepped = {
        "W1":  jnp.zeros((D, Hp), cd).at[:, :H].set(W1p.astype(cd)),
        "b1":  jnp.zeros((1, Hp), f32).at[:, :H].set(b1p),
        "Wf":  jnp.zeros((Hp, Hp), cd).at[:H, :H].set(Wf.astype(cd)),
        "pbf": jnp.zeros((1, Hp), f32).at[:, :H].set(pbf),
        "P2":  jnp.zeros((Hp, OUT), cd).at[:H, :1].set(P2.astype(cd)),
        "pb2": jnp.zeros((1, OUT), f32).at[:, :1].set(pb2),
    }
    meta = {"D": D, "H": H, "Hp": Hp, "OUT": OUT, "compute_dtype": cd}
    return prepped, meta


def composed_potential_forward(x, prepped, meta, *, block_b=4096,
                               min_grid_steps=4):
    B, D = x.shape
    assert D == meta["D"]
    cd, Hp, OUT = meta["compute_dtype"], meta["Hp"], meta["OUT"]
    itemsize = jnp.dtype(cd).itemsize

    # Batch tile: big (amortize ~0.35 us/step) but keep >= min_grid_steps so
    # the "parallel" axis actually shards across v7x's two TensorCores.
    sub = 16 if itemsize < 4 else 8                         # bf16 sublane min 16
    tb = max(sub, min(block_b, _round_up(pl.cdiv(B, min_grid_steps), sub)))
    Bp = _round_up(B, tb)

    xc = x.astype(cd)
    if Bp != B:
        xc = jnp.zeros((Bp, D), cd).at[:B].set(xc)          # batch pad only

    full = lambda r, c: pl.BlockSpec((r, c), lambda i: (0, 0))
    grid = (Bp // tb,)

    # VMEM budget (double-buffered tiles + resident weights); only raise the
    # limit when the estimate exceeds the smallest scoped default (v5e 16MiB).
    w_bytes = ((D * Hp + Hp * Hp + Hp * OUT) * itemsize + (2 * Hp + OUT) * 4)
    io_bytes = tb * D * itemsize + tb * OUT * 4
    vmem_est = 2 * (w_bytes + io_bytes)
    cp = {"dimension_semantics": ("parallel",)}
    if vmem_est > (16 << 20):
        cp["vmem_limit_bytes"] = int(vmem_est + (4 << 20))

    out = pl.pallas_call(
        composed_potential_kernel,
        out_shape=jax.ShapeDtypeStruct((Bp, OUT), jnp.float32),
        grid=grid,
        in_specs=[
            pl.BlockSpec((tb, D), lambda i: (i, 0)),        # x tile, D unpadded
            full(D, Hp), full(1, Hp),                       # W1', b1'
            full(Hp, Hp), full(1, Hp),                      # Wf, pbf
            full(Hp, OUT), full(1, OUT),                    # P2, pb2 (narrow)
        ],
        out_specs=pl.BlockSpec((tb, OUT), lambda i: (i, 0)),
        compiler_params=pltpu.CompilerParams(**cp),
    )(xc, prepped["W1"], prepped["b1"], prepped["Wf"], prepped["pbf"],
      prepped["P2"], prepped["pb2"])

    return out[:B, :1]


def reference_forward(x, goal, p):
    def norm(v):
        return v * p["scaling"] + p["bias"]

    def taskmap(v):
        return jnp.tanh(v @ p["W1"] + p["b1"]) @ p["W2"] + p["b2"]

    z = taskmap(norm(x)) - taskmap(norm(goal))
    return jnp.tanh(z @ p["P1"] + p["pb1"]) @ p["P2"] + p["pb2"]


def make_params(key, n_inputs, hidden):
    ks = jax.random.split(key, 4)
    scale = lambda k, shp, fan_in: (jax.random.normal(k, shp, jnp.float32)
                                    / jnp.sqrt(jnp.float32(fan_in)))
    return {
        # normalization taskmap (elementwise affine)
        "scaling": jnp.linspace(0.5, 1.5, n_inputs, dtype=jnp.float32)[None, :],
        "bias":    jnp.linspace(-0.1, 0.1, n_inputs, dtype=jnp.float32)[None, :],
        # latent taskmap MLP (D -> H -> D)
        "W1": scale(ks[0], (n_inputs, hidden), n_inputs),
        "b1": 0.01 * jnp.ones((1, hidden), jnp.float32),
        "W2": scale(ks[1], (hidden, n_inputs), hidden),
        "b2": 0.01 * jnp.ones((1, n_inputs), jnp.float32),
        # latent potential MLP (D -> H -> 1)
        "P1": scale(ks[2], (n_inputs, hidden), n_inputs),
        "pb1": 0.01 * jnp.ones((1, hidden), jnp.float32),
        "P2": scale(ks[3], (hidden, 1), hidden),
        "pb2": jnp.zeros((1, 1), jnp.float32),
    }


if __name__ == "__main__":
    key = jax.random.PRNGKey(0)
    B, D, H = 16, 8, 32          # batch, n_inputs, hidden width

    k_x, k_g, k_p = jax.random.split(key, 3)
    x = jax.random.normal(k_x, (B, D), jnp.float32)
    goal = jax.random.normal(k_g, (1, D), jnp.float32)
    params = make_params(k_p, D, H)

    ref = reference_forward(x, goal, params)

    # f32 path: proves the fusion algebra exactly (2 grid steps at this B).
    prep32, meta32 = prepare_weights(params, goal, compute_dtype=jnp.float32)
    phi32 = jax.block_until_ready(
        composed_potential_forward(x, prep32, meta32, block_b=8))
    assert phi32.shape == (B, 1)
    assert jnp.allclose(phi32, ref, atol=1e-5, rtol=1e-5), (phi32, ref)

    # bf16 MXU-operand path (f32 accumulation): tolerance loosened for bf16.
    prep16, meta16 = prepare_weights(params, goal, compute_dtype=jnp.bfloat16)
    phi16 = jax.block_until_ready(
        composed_potential_forward(x, prep16, meta16, block_b=16))
    assert phi16.shape == (B, 1)
    assert jnp.allclose(phi16, ref, atol=5e-2, rtol=5e-2), (phi16, ref)

    print("KERNEL_OK")
</pallas_src>

<mosaic_0001>
module attributes {stable_mosaic.version = 11 : i64} {
  func.func @composed_potential_kernel(%arg0: i32, %arg1: memref<8x8xf32, #tpu.memory_space<vmem>>, %arg2: memref<8x128xf32, #tpu.memory_space<vmem>>, %arg3: memref<1x128xf32, #tpu.memory_space<vmem>>, %arg4: memref<128x128xf32, #tpu.memory_space<vmem>>, %arg5: memref<1x128xf32, #tpu.memory_space<vmem>>, %arg6: memref<128x8xf32, #tpu.memory_space<vmem>>, %arg7: memref<1x8xf32, #tpu.memory_space<vmem>>, %arg8: memref<8x8xf32, #tpu.memory_space<vmem>>) attributes {dimension_semantics = [#tpu.dimension_semantics<parallel>], iteration_bounds = array<i64: 2>, scalar_prefetch = 0 : i64, scratch_operands = 0 : i64, tpu.core_type = #tpu.core_type<tc>, window_params = [{transform_indices = @transform_0, window_bounds = array<i64: 8, 8>}, {pipeline_mode = #tpu.pipeline_mode<synchronous>, transform_indices = @transform_1, window_bounds = array<i64: 8, 128>}, {pipeline_mode = #tpu.pipeline_mode<synchronous>, transform_indices = @transform_2, window_bounds = array<i64: 1, 128>}, {pipeline_mode = #tpu.pipeline_mode<synchronous>, transform_indices = @transform_3, window_bounds = array<i64: 128, 128>}, {pipeline_mode = #tpu.pipeline_mode<synchronous>, transform_indices = @transform_4, window_bounds = array<i64: 1, 128>}, {pipeline_mode = #tpu.pipeline_mode<synchronous>, transform_indices = @transform_5, window_bounds = array<i64: 128, 8>}, {pipeline_mode = #tpu.pipeline_mode<synchronous>, transform_indices = @transform_6, window_bounds = array<i64: 1, 8>}, {transform_indices = @transform_7, window_bounds = array<i64: 8, 8>}]} {
    %c0 = arith.constant 0 : index
    %c0_0 = arith.constant 0 : index
    %0 = vector.load %arg1[%c0, %c0_0] : memref<8x8xf32, #tpu.memory_space<vmem>>, vector<8x8xf32>
    %c0_1 = arith.constant 0 : index
    %c0_2 = arith.constant 0 : index
    %1 = vector.load %arg2[%c0_1, %c0_2] : memref<8x128xf32, #tpu.memory_space<vmem>>, vector<8x128xf32>
    %cst = arith.constant dense<0.000000e+00> : vector<8x128xf32>
    %2 = tpu.matmul %0, %1, %cst {dimension_numbers = #tpu.dot_dimension_numbers<[1], [0], [0], [1], [0, 0, 1, 1], [], []>} : vector<8x8xf32>, vector<8x128xf32>, vector<8x128xf32> -> vector<8x128xf32>
    %c0_3 = arith.constant 0 : index
    %c0_4 = arith.constant 0 : index
    %3 = vector.load %arg3[%c0_3, %c0_4] : memref<1x128xf32, #tpu.memory_space<vmem>>, vector<1x128xf32>
    %4 = vector.broadcast %3 : vector<1x128xf32> to vector<8x128xf32>
    %5 = arith.addf %2, %4 : vector<8x128xf32>
    %6 = math.tanh %5 : vector<8x128xf32>
    %c0_5 = arith.constant 0 : index
    %c0_6 = arith.constant 0 : index
    %7 = vector.load %arg4[%c0_5, %c0_6] : memref<128x128xf32, #tpu.memory_space<vmem>>, vector<128x128xf32>
    %cst_7 = arith.constant dense<0.000000e+00> : vector<8x128xf32>
    %8 = tpu.matmul %6, %7, %cst_7 {dimension_numbers = #tpu.dot_dimension_numbers<[1], [0], [0], [1], [0, 0, 1, 1], [], []>} : vector<8x128xf32>, vector<128x128xf32>, vector<8x128xf32> -> vector<8x128xf32>
    %c0_8 = arith.constant 0 : index
    %c0_9 = arith.constant 0 : index
    %9 = vector.load %arg5[%c0_8, %c0_9] : memref<1x128xf32, #tpu.memory_space<vmem>>, vector<1x128xf32>
    %10 = vector.broadcast %9 : vector<1x128xf32> to vector<8x128xf32>
    %11 = arith.addf %8, %10 : vector<8x128xf32>
    %12 = math.tanh %11 : vector<8x128xf32>
    %c0_10 = arith.constant 0 : index
    %c0_11 = arith.constant 0 : index
    %13 = vector.load %arg6[%c0_10, %c0_11] : memref<128x8xf32, #tpu.memory_space<vmem>>, vector<128x8xf32>
    %cst_12 = arith.constant dense<0.000000e+00> : vector<8x8xf32>
    %14 = tpu.matmul %12, %13, %cst_12 {dimension_numbers = #tpu.dot_dimension_numbers<[1], [0], [0], [1], [0, 0, 1, 1], [], []>} : vector<8x128xf32>, vector<128x8xf32>, vector<8x8xf32> -> vector<8x8xf32>
    %c0_13 = arith.constant 0 : index
    %c0_14 = arith.constant 0 : index
    %15 = vector.load %arg7[%c0_13, %c0_14] : memref<1x8xf32, #tpu.memory_space<vmem>>, vector<1x8xf32>
    %16 = vector.broadcast %15 : vector<1x8xf32> to vector<8x8xf32>
    %17 = arith.addf %14, %16 : vector<8x8xf32>
    %c0_15 = arith.constant 0 : index
    %c0_16 = arith.constant 0 : index
    %18 = vector.load %arg8[%c0_15, %c0_16] : memref<8x8xf32, #tpu.memory_space<vmem>>, vector<8x8xf32>
    tpu.vector_store %arg8[%c0_15, %c0_16], %17 {strides = array<i32>} : memref<8x8xf32, #tpu.memory_space<vmem>>, vector<8x8xf32>,
    return
  }
  func.func @transform_0(%arg0: i32) -> (i32, i32) {
    %c0_i32 = arith.constant 0 : i32
    %c0_i32_0 = arith.constant 0 : i32
    return %arg0, %c0_i32 : i32, i32
  }
  func.func @transform_1(%arg0: i32) -> (i32, i32) {
    %c0_i32 = arith.constant 0 : i32
    %c0_i32_0 = arith.constant 0 : i32
    %c0_i32_1 = arith.constant 0 : i32
    return %c0_i32, %c0_i32_0 : i32, i32
  }
  func.func @transform_2(%arg0: i32) -> (i32, i32) {
    %c0_i32 = arith.constant 0 : i32
    %c0_i32_0 = arith.constant 0 : i32
    %c0_i32_1 = arith.constant 0 : i32
    return %c0_i32, %c0_i32_0 : i32, i32
  }
  func.func @transform_3(%arg0: i32) -> (i32, i32) {
    %c0_i32 = arith.constant 0 : i32
    %c0_i32_0 = arith.constant 0 : i32
    %c0_i32_1 = arith.constant 0 : i32
    return %c0_i32, %c0_i32_0 : i32, i32
  }
  func.func @transform_4(%arg0: i32) -> (i32, i32) {
    %c0_i32 = arith.constant 0 : i32
    %c0_i32_0 = arith.constant 0 : i32
    %c0_i32_1 = arith.constant 0 : i32
    return %c0_i32, %c0_i32_0 : i32, i32
  }
  func.func @transform_5(%arg0: i32) -> (i32, i32) {
    %c0_i32 = arith.constant 0 : i32
    %c0_i32_0 = arith.constant 0 : i32
    %c0_i32_1 = arith.constant 0 : i32
    return %c0_i32, %c0_i32_0 : i32, i32
  }
  func.func @transform_6(%arg0: i32) -> (i32, i32) {
    %c0_i32 = arith.constant 0 : i32
    %c0_i32_0 = arith.constant 0 : i32
    %c0_i32_1 = arith.constant 0 : i32
    return %c0_i32, %c0_i32_0 : i32, i32
  }
  func.func @transform_7(%arg0: i32) -> (i32, i32) {
    %c0_i32 = arith.constant 0 : i32
    %c0_i32_0 = arith.constant 0 : i32
    return %arg0, %c0_i32 : i32, i32
  }
}

</mosaic_0001>

<llo_original>
// kernel: tpu_custom_call.1
$region0: #{tpu_custom_call.1}
  #allocation0 [shape = 'u32[]', space=smem, size = 0x4, offset = 0x4, fixed_abs, tag = 'smem constant byte address 0x4 - core index']
  #allocation1 [shape = 'u32[144,128]{1,0:T(1,128)}', space=vmem, size = 0x12000, scoped, tag = 'internal scratch']
  %s0 = inlined_call_operand.vmem [shape: f32[16,8], index: 0, kind: input, shape index: {}]
  %s1 = inlined_call_operand.vmem [shape: f32[8,128], index: 1, kind: input, shape index: {}]
  %s2 = inlined_call_operand.vmem [shape: f32[1,128], index: 2, kind: input, shape index: {}]
  %s3 = inlined_call_operand.vmem [shape: f32[128,128], index: 3, kind: input, shape index: {}]
  %s4 = inlined_call_operand.vmem [shape: f32[1,128], index: 4, kind: input, shape index: {}]
  %s5 = inlined_call_operand.vmem [shape: f32[128,8], index: 5, kind: input, shape index: {}]
  %s6 = inlined_call_operand.vmem [shape: f32[1,8], index: 6, kind: input, shape index: {}]
  %s7 = inlined_call_operand.vmem [shape: f32[16,8], index: 7, kind: output, shape index: {}]
  %s8 = sld [smem:[#allocation0]]
  $region61: #{tpu_custom_call.1} parent=0
    _
  %s10 = ssub.s32 1, %s8
  %s11 = scalar_select 0, %s10, %s8
  loop: start=0, step=1, limit=4
  $region2: #{tpu_custom_call.1} parent=0 // loop_pre_header
    _
  $region3: #{tpu_custom_call.1} parent=0 // loop_header
    %s13 = sphi 0, %s17
    %p14 = scmp.ge.s32.totalorder %s13, 4
    %s23 = sphi 0, %s25
    %s26 = sphi 0, %s23
    %s27 = sphi 0, %s26
    %s43 = sphi 0, %s27
    %s47 = sphi 0, %s47
    %s49 = sphi 0, %s47
    %s50 = sphi 0, %s49
    %s64 = sphi 0, %s50
    %s68 = sphi 0, %s68
    %s70 = sphi 0, %s68
    %s71 = sphi 0, %s70
    %s85 = sphi 0, %s71
    %s89 = sphi 0, %s89
    %s91 = sphi 0, %s89
    %s92 = sphi 0, %s91
    %s106 = sphi 0, %s92
    %s110 = sphi 0, %s110
    %s112 = sphi 0, %s110
    %s113 = sphi 0, %s112
    %s127 = sphi 0, %s113
    %s131 = sphi 0, %s131
    %s133 = sphi 0, %s131
    %s134 = sphi 0, %s133
    %s148 = sphi 0, %s134
    %s152 = sphi 0, %s152
    %s154 = sphi 0, %s152
    %s155 = sphi 0, %s154
    %s169 = sphi 0, %s155
    %s175 = sphi 0, %s177
    %s178 = sphi 0, %s175
    %s179 = sphi 0, %s178
    %s195 = sphi 0, %s179
  $region4: #{tpu_custom_call.1} parent=0 // loop_header_branch
    %16 = sbr.rel (%p14) target = $region8
  $region5: #{tpu_custom_call.1} parent=0 // loop_body
    %s18 = ssub.s32 %s13, 1
    %s19 = ssub.s32 %s13, 2
    %s20 = sadd.s32 %s13, 1
    %s21 = ssub.s32 %s13, %s20
    %p22 = scmp.eq.s32.totalorder %s21, 0
    %s24 = sadd.s32 %s23, 1
    %s25 = scalar_select %p22, %s23, %s24
    %p28 = pneg %p22
    %p29 = scmp.eq.s32.totalorder %s13, 1
    %p30 = por %p28, %p29
    %p31 = scmp.ne.s32.totalorder %s23, %s26
    %p32 = scmp.eq.s32.totalorder %s13, 0
    %p33 = por %p31, %p32
    %p34 = scmp.ne.s32.totalorder %s23, %s26
    %p35 = scmp.eq.s32.totalorder %s18, 1
    %p36 = por %p34, %p35
    %p37 = scmp.ne.s32.totalorder %s26, %s27
    %p38 = scmp.eq.s32.totalorder %s18, 0
    %p39 = por %p37, %p38
    %p40 = scmp.ne.s32.totalorder %s26, %s27
    %p41 = scmp.eq.s32.totalorder %s19, 1
    %p42 = por %p40, %p41
    %p44 = scmp.ne.s32.totalorder %s27, %s43
    %p45 = scmp.eq.s32.totalorder %s19, 0
    %p46 = por %p44, %p45
    %s48 = sadd.s32 %s47, 1
    %p51 = scmp.eq.s32.totalorder %s13, 1
    %p52 = scmp.ne.s32.totalorder %s47, %s49
    %p53 = scmp.eq.s32.totalorder %s13, 0
    %p54 = por %p52, %p53
    %p55 = scmp.ne.s32.totalorder %s47, %s49
    %p56 = scmp.eq.s32.totalorder %s18, 1
    %p57 = por %p55, %p56
    %p58 = scmp.ne.s32.totalorder %s49, %s50
    %p59 = scmp.eq.s32.totalorder %s18, 0
    %p60 = por %p58, %p59
    %p61 = scmp.ne.s32.totalorder %s49, %s50
    %p62 = scmp.eq.s32.totalorder %s19, 1
    %p63 = por %p61, %p62
    %p65 = scmp.ne.s32.totalorder %s50, %s64
    %p66 = scmp.eq.s32.totalorder %s19, 0
    %p67 = por %p65, %p66
    %s69 = sadd.s32 %s68, 1
    %p72 = scmp.eq.s32.totalorder %s13, 1
    %p73 = scmp.ne.s32.totalorder %s68, %s70
    %p74 = scmp.eq.s32.totalorder %s13, 0
    %p75 = por %p73, %p74
    %p76 = scmp.ne.s32.totalorder %s68, %s70
    %p77 = scmp.eq.s32.totalorder %s18, 1
    %p78 = por %p76, %p77
    %p79 = scmp.ne.s32.totalorder %s70, %s71
    %p80 = scmp.eq.s32.totalorder %s18, 0
    %p81 = por %p79, %p80
    %p82 = scmp.ne.s32.totalorder %s70, %s71
    %p83 = scmp.eq.s32.totalorder %s19, 1
    %p84 = por %p82, %p83
    %p86 = scmp.ne.s32.totalorder %s71, %s85
    %p87 = scmp.eq.s32.totalorder %s19, 0
    %p88 = por %p86, %p87
    %s90 = sadd.s32 %s89, 1
    %p93 = scmp.eq.s32.totalorder %s13, 1
    %p94 = scmp.ne.s32.totalorder %s89, %s91
    %p95 = scmp.eq.s32.totalorder %s13, 0
    %p96 = por %p94, %p95
    %p97 = scmp.ne.s32.totalorder %s89, %s91
    %p98 = scmp.eq.s32.totalorder %s18, 1
    %p99 = por %p97, %p98
    %p100 = scmp.ne.s32.totalorder %s91, %s92
    %p101 = scmp.eq.s32.totalorder %s18, 0
    %p102 = por %p100, %p101
    %p103 = scmp.ne.s32.totalorder %s91, %s92
    %p104 = scmp.eq.s32.totalorder %s19, 1
    %p105 = por %p103, %p104
    %p107 = scmp.ne.s32.totalorder %s92, %s106
    %p108 = scmp.eq.s32.totalorder %s19, 0
    %p109 = por %p107, %p108
    %s111 = sadd.s32 %s110, 1
    %p114 = scmp.eq.s32.totalorder %s13, 1
    %p115 = scmp.ne.s32.totalorder %s110, %s112
    %p116 = scmp.eq.s32.totalorder %s13, 0
    %p117 = por %p115, %p116
    %p118 = scmp.ne.s32.totalorder %s110, %s112
    %p119 = scmp.eq.s32.totalorder %s18, 1
    %p120 = por %p118, %p119
    %p121 = scmp.ne.s32.totalorder %s112, %s113
    %p122 = scmp.eq.s32.totalorder %s18, 0
    %p123 = por %p121, %p122
    %p124 = scmp.ne.s32.totalorder %s112, %s113
    %p125 = scmp.eq.s32.totalorder %s19, 1
    %p126 = por %p124, %p125
    %p128 = scmp.ne.s32.totalorder %s113, %s127
    %p129 = scmp.eq.s32.totalorder %s19, 0
    %p130 = por %p128, %p129
    %s132 = sadd.s32 %s131, 1
    %p135 = scmp.eq.s32.totalorder %s13, 1
    %p136 = scmp.ne.s32.totalorder %s131, %s133
    %p137 = scmp.eq.s32.totalorder %s13, 0
    %p138 = por %p136, %p137
    %p139 = scmp.ne.s32.totalorder %s131, %s133
    %p140 = scmp.eq.s32.totalorder %s18, 1
    %p141 = por %p139, %p140
    %p142 = scmp.ne.s32.totalorder %s133, %s134
    %p143 = scmp.eq.s32.totalorder %s18, 0
    %p144 = por %p142, %p143
    %p145 = scmp.ne.s32.totalorder %s133, %s134
    %p146 = scmp.eq.s32.totalorder %s19, 1
    %p147 = por %p145, %p146
    %p149 = scmp.ne.s32.totalorder %s134, %s148
    %p150 = scmp.eq.s32.totalorder %s19, 0
    %p151 = por %p149, %p150
    %s153 = sadd.s32 %s152, 1
    %p156 = scmp.eq.s32.totalorder %s13, 1
    %p157 = scmp.ne.s32.totalorder %s152, %s154
    %p158 = scmp.eq.s32.totalorder %s13, 0
    %p159 = por %p157, %p158
    %p160 = scmp.ne.s32.totalorder %s152, %s154
    %p161 = scmp.eq.s32.totalorder %s18, 1
    %p162 = por %p160, %p161
    %p163 = scmp.ne.s32.totalorder %s154, %s155
    %p164 = scmp.eq.s32.totalorder %s18, 0
    %p165 = por %p163, %p164
    %p166 = scmp.ne.s32.totalorder %s154, %s155
    %p167 = scmp.eq.s32.totalorder %s19, 1
    %p168 = por %p166, %p167
    %p170 = scmp.ne.s32.totalorder %s155, %s169
    %p171 = scmp.eq.s32.totalorder %s19, 0
    %p172 = por %p170, %p171
    %s173 = ssub.s32 %s13, %s20
    %p174 = scmp.eq.s32.totalorder %s173, 0
    %s176 = sadd.s32 %s175, 1
    %s177 = scalar_select %p174, %s175, %s176
    %p180 = pneg %p174
    %p181 = scmp.eq.s32.totalorder %s13, 1
    %p182 = por %p180, %p181
    %p183 = scmp.ne.s32.totalorder %s175, %s178
    %p184 = scmp.eq.s32.totalorder %s13, 0
    %p185 = por %p183, %p184
    %p186 = scmp.ne.s32.totalorder %s175, %s178
    %p187 = scmp.eq.s32.totalorder %s18, 1
    %p188 = por %p186, %p187
    %p189 = scmp.ne.s32.totalorder %s178, %s179
    %p190 = scmp.eq.s32.totalorder %s18, 0
    %p191 = por %p189, %p190
    %p192 = scmp.ne.s32.totalorder %s178, %s179
    %p193 = scmp.eq.s32.totalorder %s19, 1
    %p194 = por %p192, %p193
    %p196 = scmp.ne.s32.totalorder %s179, %s195
    %p197 = scmp.eq.s32.totalorder %s19, 0
    %p198 = por %p196, %p197
    %p199 = scmp.le.s32.totalorder 1, %s13
    %p200 = scmp.lt.s32.totalorder %s13, 3
    %p201 = pnand %p199, %p200
    %p202 = pneg %p201
    // Predicated region
    $region9: #{tpu_custom_call.1} parent=5 // pred_check
      _
    $region10: #{tpu_custom_call.1} parent=5 // pred_check_branch
      %204 = sbr.rel (%p201) target = $region12
    $region11: #{tpu_custom_call.1} parent=5 // pred_region
      %s205 = ssub.s32 %s13, 1
      // Predicated region
      $region13: #{tpu_custom_call.1} parent=11 // pred_check
        %p206 = pneg %p60
      $region14: #{tpu_custom_call.1} parent=11 // pred_check_branch
        %208 = sbr.rel (%p206) target = $region16
      $region15: #{tpu_custom_call.1} parent=11 // pred_region
        _
      $region16: #{tpu_custom_call.1} parent=11 // pred_fallthru
        _
      // Predicated region
      $region17: #{tpu_custom_call.1} parent=11 // pred_check
        %p209 = pneg %p81
      $region18: #{tpu_custom_call.1} parent=11 // pred_check_branch
        %211 = sbr.rel (%p209) target = $region20
      $region19: #{tpu_custom_call.1} parent=11 // pred_region
        _
      $region20: #{tpu_custom_call.1} parent=11 // pred_fallthru
        _
      // Predicated region
      $region21: #{tpu_custom_call.1} parent=11 // pred_check
        %p212 = pneg %p102
      $region22: #{tpu_custom_call.1} parent=11 // pred_check_branch
        %214 = sbr.rel (%p212) target = $region24
      $region23: #{tpu_custom_call.1} parent=11 // pred_region
        _
      $region24: #{tpu_custom_call.1} parent=11 // pred_fallthru
        _
      // Predicated region
      $region25: #{tpu_custom_call.1} parent=11 // pred_check
        %p215 = pneg %p123
      $region26: #{tpu_custom_call.1} parent=11 // pred_check_branch
        %217 = sbr.rel (%p215) target = $region28
      $region27: #{tpu_custom_call.1} parent=11 // pred_region
        _
      $region28: #{tpu_custom_call.1} parent=11 // pred_fallthru
        _
      // Predicated region
      $region29: #{tpu_custom_call.1} parent=11 // pred_check
        %p218 = pneg %p144
      $region30: #{tpu_custom_call.1} parent=11 // pred_check_branch
        %220 = sbr.rel (%p218) target = $region32
      $region31: #{tpu_custom_call.1} parent=11 // pred_region
        _
      $region32: #{tpu_custom_call.1} parent=11 // pred_fallthru
        _
      // Predicated region
      $region33: #{tpu_custom_call.1} parent=11 // pred_check
        %p221 = pneg %p165
      $region34: #{tpu_custom_call.1} parent=11 // pred_check_branch
        %223 = sbr.rel (%p221) target = $region36
      $region35: #{tpu_custom_call.1} parent=11 // pred_region
        _
      $region36: #{tpu_custom_call.1} parent=11 // pred_fallthru
        _
    $region12: #{tpu_custom_call.1} parent=5 // pred_fallthru
      _
    %p224 = scmp.lt.s32.totalorder %s13, 2
    // Predicated region
    $region37: #{tpu_custom_call.1} parent=5 // pred_check
      %p225 = pneg %p224
    $region38: #{tpu_custom_call.1} parent=5 // pred_check_branch
      %227 = sbr.rel (%p225) target = $region40
    $region39: #{tpu_custom_call.1} parent=5 // pred_region
      // Predicated region
      $region41: #{tpu_custom_call.1} parent=39 // pred_check
        %p228 = pneg %p33
      $region42: #{tpu_custom_call.1} parent=39 // pred_check_branch
        %230 = sbr.rel (%p228) target = $region44
      $region43: #{tpu_custom_call.1} parent=39 // pred_region
        %p231 = scmp.lt.s32.totalorder %s13, 1
        %s232 = scalar_select %p231, %s13, 1
        %s233 = smul.addr %s232, 8
        %s234 = scalar_lea.vmem %s0, %s233
      $region44: #{tpu_custom_call.1} parent=39 // pred_fallthru
        _
    $region40: #{tpu_custom_call.1} parent=5 // pred_fallthru
      _
    %p235 = scmp.le.s32.totalorder 1, %s13
    %p236 = scmp.lt.s32.totalorder %s13, 3
    %p237 = pnand %p235, %p236
    %p238 = pneg %p237
    // Predicated region
    $region45: #{tpu_custom_call.1} parent=5 // pred_check
      _
    $region46: #{tpu_custom_call.1} parent=5 // pred_check_branch
      %240 = sbr.rel (%p237) target = $region48
    $region47: #{tpu_custom_call.1} parent=5 // pred_region
      %s241 = ssub.s32 %s13, 1
      %p242 = scmp.lt.s32.totalorder %s18, 1
      %s243 = scalar_select %p242, %s18, 1
      %s244 = smul.addr %s243, 8
      %s245 = scalar_lea.vmem %s0, %s244
      %p246 = pneg %p39
      %p247 = pneg %p36
      %p248 = pneg %p60
      %p249 = pneg %p57
      %p250 = pneg %p81
      %p251 = pneg %p78
      %p252 = pneg %p102
      %p253 = pneg %p99
      %p254 = pneg %p123
      %p255 = pneg %p120
      %p256 = pneg %p144
      %p257 = pneg %p141
      %p258 = pneg %p165
      %p259 = pneg %p162
      %p260 = pneg %p191
      %p261 = pneg %p188
      %p262 = scmp.lt.s32.totalorder %s18, 1
      %s263 = scalar_select %p262, %s18, 1
      %s264 = smul.addr %s263, 8
      %s265 = scalar_lea.vmem %s7, %s264
      %p266 = scmp.lt.s32.totalorder %s18, 1
      %s267 = scalar_select %p266, %s18, 1
      %s268 = smul.addr %s267, 8
      %s269 = scalar_lea.vmem %s0, %s268
      %p270 = scmp.lt.s32.totalorder %s18, 1
      %s271 = scalar_select %p270, %s18, 1
      %s272 = smul.addr %s271, 8
      %s273 = scalar_lea.vmem %s7, %s272
      %v274 = vld [vmem:[%s269] sm:$0xff]
      %v275 = vld [vmem:[%s1] sm:$0xff]
      %v276 = vld [vmem:[%s2] sm:$0x1]
      %v278 = vlaneseq
      %v279 = vshrl.u32 %v278, 7
      %v280 = vsub.s32 0, %v279
      %v281 = vrot.slane %v276, %v280
      %vm283 = vcmask 64512
      %v285 = vsel %vm283, %v274, 0
      %287 = vmatprep.subr.mxu0 0.0
      %288 = vmatpush1.msra.mxu0 %v275
      %289 = vmatprep.subr.mxu0 0.0
      %290 = vmatpush1.msra.mxu0 0.0
      %291 = vmatprep.subr.mxu0 0.0
      %292 = vmatpush1.msra.mxu0 0.0
      %293 = vmatprep.subr.mxu0 0.0
      %294 = vmatpush1.msra.mxu0 0.0
      %295 = vmatprep.subr.mxu0 0.0
      %296 = vmatpush1.msra.mxu0 0.0
      %297 = vmatprep.subr.mxu0 0.0
      %298 = vmatpush1.msra.mxu0 0.0
      %299 = vmatprep.subr.mxu0 0.0
      %300 = vmatpush1.msra.mxu0 0.0
      %301 = vmatprep.subr.mxu0 0.0
      %302 = vmatpush1.msra.mxu0 0.0
      %303 = vmatprep.subr.mxu0 0.0
      %304 = vmatpush1.msra.mxu0 0.0
      %305 = vmatprep.subr.mxu0 0.0
      %306 = vmatpush1.msra.mxu0 0.0
      %307 = vmatprep.subr.mxu0 0.0
      %308 = vmatpush1.msra.mxu0 0.0
      %309 = vmatprep.subr.mxu0 0.0
      %310 = vmatpush1.msra.mxu0 0.0
      %311 = vmatprep.subr.mxu0 0.0
      %312 = vmatpush1.msra.mxu0 0.0
      %313 = vmatprep.subr.mxu0 0.0
      %314 = vmatpush1.msra.mxu0 0.0
      %315 = vmatprep.subr.mxu0 0.0
      %316 = vmatpush1.msra.mxu0 0.0
      %317 = vmatprep.subr.mxu0 0.0
      %318 = vmatpush1.msra.mxu0 0.0
      %319 = vmatprep.subr.mxu0 0.0
      %320 = vmatpush1.msra.mxu0 0.0
      %321 = vmatprep.subr.mxu0 0.0
      %322 = vmatpush1.msra.mxu0 0.0
      %323 = vmatprep.subr.mxu0 0.0
      %324 = vmatpush1.msra.mxu0 0.0
      %325 = vmatprep.subr.mxu0 0.0
      %326 = vmatpush1.msra.mxu0 0.0
      %327 = vmatprep.subr.mxu0 0.0
      %328 = vmatpush1.msra.mxu0 0.0
      %329 = vmatprep.subr.mxu0 0.0
      %330 = vmatpush1.msra.mxu0 0.0
      %331 = vmatprep.subr.mxu0 0.0
      %332 = vmatpush1.msra.mxu0 0.0
      %333 = vmatprep.subr.mxu0 0.0
      %334 = vmatpush1.msra.mxu0 0.0
      %335 = vmatprep.subr.mxu0 0.0
      %336 = vmatpush1.msra.mxu0 0.0
      %337 = vmatprep.subr.mxu0 0.0
      %338 = vmatpush1.msra.mxu0 0.0
      %339 = vmatprep.subr.mxu0 0.0
      %340 = vmatpush1.msra.mxu0 0.0
      %341 = vmatprep.subr.mxu0 0.0
      %342 = vmatpush1.msra.mxu0 0.0
      %343 = vmatprep.subr.mxu0 0.0
      %344 = vmatpush1.msra.mxu0 0.0
      %345 = vmatprep.subr.mxu0 0.0
      %346 = vmatpush1.msra.mxu0 0.0
      %347 = vmatprep.subr.mxu0 0.0
      %348 = vmatpush1.msra.mxu0 0.0
      %349 = vmatprep.subr.mxu0 0.0
      %350 = vmatpush1.msra.mxu0 0.0
      %351 = vmatprep.mubr.f32.mxu0 0.0
      %352 = vmatmul.mubr.f32.gmra.mrb[0].mxu0 %v285
      %v353 = vpop.f32.mrb[0].mxu0
      %v354 = vadd.f32 %v281, %v353
      %v355 = vpop.f32.mrb[0].mxu0
      %356 = vdwg.mxu0
      %v357 = vtanh.pop %v354
      %v358 = vld [vmem:[%s3] sm:$0xff]
      %v359 = vld [vmem:[%s3 + $0x8] sm:$0xff]
      %v360 = vld [vmem:[%s3 + $0x10] sm:$0xff]
      %v361 = vld [vmem:[%s3 + $0x18] sm:$0xff]
      %v362 = vld [vmem:[%s3 + $0x20] sm:$0xff]
      %v363 = vld [vmem:[%s3 + $0x28] sm:$0xff]
      %v364 = vld [vmem:[%s3 + $0x30] sm:$0xff]
      %v365 = vld [vmem:[%s3 + $0x38] sm:$0xff]
      %v366 = vld [vmem:[%s3 + $0x40] sm:$0xff]
      %v367 = vld [vmem:[%s3 + $0x48] sm:$0xff]
      %v368 = vld [vmem:[%s3 + $0x50] sm:$0xff]
      %v369 = vld [vmem:[%s3 + $0x58] sm:$0xff]
      %v370 = vld [vmem:[%s3 + $0x60] sm:$0xff]
      %v371 = vld [vmem:[%s3 + $0x68] sm:$0xff]
      %v372 = vld [vmem:[%s3 + $0x70] sm:$0xff]
      %v373 = vld [vmem:[%s3 + $0x78] sm:$0xff]
      %v374 = vld [vmem:[%s4] sm:$0x1]
      %v376 = vlaneseq
      %v377 = vshrl.u32 %v376, 7
      %v378 = vsub.s32 0, %v377
      %v379 = vrot.slane %v374, %v378
      %381 = vmatprep.subr.mxu0 0.0
      %382 = vmatpush1.msra.mxu0 %v358
      %383 = vmatprep.subr.mxu0 0.0
      %384 = vmatpush1.msra.mxu0 %v359
      %385 = vmatprep.subr.mxu0 0.0
      %386 = vmatpush1.msra.mxu0 %v360
      %387 = vmatprep.subr.mxu0 0.0
      %388 = vmatpush1.msra.mxu0 %v361
      %389 = vmatprep.subr.mxu0 0.0
      %390 = vmatpush1.msra.mxu0 %v362
      %391 = vmatprep.subr.mxu0 0.0
      %392 = vmatpush1.msra.mxu0 %v363
      %393 = vmatprep.subr.mxu0 0.0
      %394 = vmatpush1.msra.mxu0 %v364
      %395 = vmatprep.subr.mxu0 0.0
      %396 = vmatpush1.msra.mxu0 %v365
      %397 = vmatprep.subr.mxu0 0.0
      %398 = vmatpush1.msra.mxu0 %v366
      %399 = vmatprep.subr.mxu0 0.0
      %400 = vmatpush1.msra.mxu0 %v367
      %401 = vmatprep.subr.mxu0 0.0
      %402 = vmatpush1.msra.mxu0 %v368
      %403 = vmatprep.subr.mxu0 0.0
      %404 = vmatpush1.msra.mxu0 %v369
      %405 = vmatprep.subr.mxu0 0.0
      %406 = vmatpush1.msra.mxu0 %v370
      %407 = vmatprep.subr.mxu0 0.0
      %408 = vmatpush1.msra.mxu0 %v371
      %409 = vmatprep.subr.mxu0 0.0
      %410 = vmatpush1.msra.mxu0 %v372
      %411 = vmatprep.subr.mxu0 0.0
      %412 = vmatpush1.msra.mxu0 %v373
      %413 = vmatprep.subr.mxu0 0.0
      %414 = vmatpush1.msra.mxu0 0.0
      %415 = vmatprep.subr.mxu0 0.0
      %416 = vmatpush1.msra.mxu0 0.0
      %417 = vmatprep.subr.mxu0 0.0
      %418 = vmatpush1.msra.mxu0 0.0
      %419 = vmatprep.subr.mxu0 0.0
      %420 = vmatpush1.msra.mxu0 0.0
      %421 = vmatprep.subr.mxu0 0.0
      %422 = vmatpush1.msra.mxu0 0.0
      %423 = vmatprep.subr.mxu0 0.0
      %424 = vmatpush1.msra.mxu0 0.0
      %425 = vmatprep.subr.mxu0 0.0
      %426 = vmatpush1.msra.mxu0 0.0
      %427 = vmatprep.subr.mxu0 0.0
      %428 = vmatpush1.msra.mxu0 0.0
      %429 = vmatprep.subr.mxu0 0.0
      %430 = vmatpush1.msra.mxu0 0.0
      %431 = vmatprep.subr.mxu0 0.0
      %432 = vmatpush1.msra.mxu0 0.0
      %433 = vmatprep.subr.mxu0 0.0
      %434 = vmatpush1.msra.mxu0 0.0
      %435 = vmatprep.subr.mxu0 0.0
      %436 = vmatpush1.msra.mxu0 0.0
      %437 = vmatprep.subr.mxu0 0.0
      %438 = vmatpush1.msra.mxu0 0.0
      %439 = vmatprep.subr.mxu0 0.0
      %440 = vmatpush1.msra.mxu0 0.0
      %441 = vmatprep.subr.mxu0 0.0
      %442 = vmatpush1.msra.mxu0 0.0
      %443 = vmatprep.subr.mxu0 0.0
      %444 = vmatpush1.msra.mxu0 0.0
      %445 = vmatprep.mubr.f32.mxu0 0.0
      %446 = vmatmul.mubr.f32.gmra.mrb[0].mxu0 %v357
      %v447 = vpop.f32.mrb[0].mxu0
      %v448 = vadd.f32 %v379, %v447
      %v449 = vpop.f32.mrb[0].mxu0
      %450 = vdwg.mxu0
      %v451 = vtanh.pop %v448
      %v452 = vld [vmem:[%s5] sm:$0xff]
      %v453 = vld [vmem:[%s5 + $0x8] sm:$0xff]
      %v454 = vld [vmem:[%s5 + $0x10] sm:$0xff]
      %v455 = vld [vmem:[%s5 + $0x18] sm:$0xff]
      %v456 = vld [vmem:[%s5 + $0x20] sm:$0xff]
      %v457 = vld [vmem:[%s5 + $0x28] sm:$0xff]
      %v458 = vld [vmem:[%s5 + $0x30] sm:$0xff]
      %v459 = vld [vmem:[%s5 + $0x38] sm:$0xff]
      %v460 = vld [vmem:[%s5 + $0x40] sm:$0xff]
      %v461 = vld [vmem:[%s5 + $0x48] sm:$0xff]
      %v462 = vld [vmem:[%s5 + $0x50] sm:$0xff]
      %v463 = vld [vmem:[%s5 + $0x58] sm:$0xff]
      %v464 = vld [vmem:[%s5 + $0x60] sm:$0xff]
      %v465 = vld [vmem:[%s5 + $0x68] sm:$0xff]
      %v466 = vld [vmem:[%s5 + $0x70] sm:$0xff]
      %v467 = vld [vmem:[%s5 + $0x78] sm:$0xff]
      %v468 = vld [vmem:[%s6] sm:$0x1]
      %v470 = vlaneseq
      %v471 = vshrl.u32 %v470, 7
      %v472 = vsub.s32 0, %v471
      %v473 = vrot.slane %v468, %v472
      %475 = vmatprep.subr.mxu0 0.0
      %476 = vmatpush1.msra.mxu0 %v452
      %477 = vmatprep.subr.mxu0 0.0
      %478 = vmatpush1.msra.mxu0 %v453
      %479 = vmatprep.subr.mxu0 0.0
      %480 = vmatpush1.msra.mxu0 %v454
      %481 = vmatprep.subr.mxu0 0.0
      %482 = vmatpush1.msra.mxu0 %v455
      %483 = vmatprep.subr.mxu0 0.0
      %484 = vmatpush1.msra.mxu0 %v456
      %485 = vmatprep.subr.mxu0 0.0
      %486 = vmatpush1.msra.mxu0 %v457
      %487 = vmatprep.subr.mxu0 0.0
      %488 = vmatpush1.msra.mxu0 %v458
      %489 = vmatprep.subr.mxu0 0.0
      %490 = vmatpush1.msra.mxu0 %v459
      %491 = vmatprep.subr.mxu0 0.0
      %492 = vmatpush1.msra.mxu0 %v460
      %493 = vmatprep.subr.mxu0 0.0
      %494 = vmatpush1.msra.mxu0 %v461
      %495 = vmatprep.subr.mxu0 0.0
      %496 = vmatpush1.msra.mxu0 %v462
      %497 = vmatprep.subr.mxu0 0.0
      %498 = vmatpush1.msra.mxu0 %v463
      %499 = vmatprep.subr.mxu0 0.0
      %500 = vmatpush1.msra.mxu0 %v464
      %501 = vmatprep.subr.mxu0 0.0
      %502 = vmatpush1.msra.mxu0 %v465
      %503 = vmatprep.subr.mxu0 0.0
      %504 = vmatpush1.msra.mxu0 %v466
      %505 = vmatprep.subr.mxu0 0.0
      %506 = vmatpush1.msra.mxu0 %v467
      %507 = vmatprep.subr.mxu0 0.0
      %508 = vmatpush1.msra.mxu0 0.0
      %509 = vmatprep.subr.mxu0 0.0
      %510 = vmatpush1.msra.mxu0 0.0
      %511 = vmatprep.subr.mxu0 0.0
      %512 = vmatpush1.msra.mxu0 0.0
      %513 = vmatprep.subr.mxu0 0.0
      %514 = vmatpush1.msra.mxu0 0.0
      %515 = vmatprep.subr.mxu0 0.0
      %516 = vmatpush1.msra.mxu0 0.0
      %517 = vmatprep.subr.mxu0 0.0
      %518 = vmatpush1.msra.mxu0 0.0
      %519 = vmatprep.subr.mxu0 0.0
      %520 = vmatpush1.msra.mxu0 0.0
      %521 = vmatprep.subr.mxu0 0.0
      %522 = vmatpush1.msra.mxu0 0.0
      %523 = vmatprep.subr.mxu0 0.0
      %524 = vmatpush1.msra.mxu0 0.0
      %525 = vmatprep.subr.mxu0 0.0
      %526 = vmatpush1.msra.mxu0 0.0
      %527 = vmatprep.subr.mxu0 0.0
      %528 = vmatpush1.msra.mxu0 0.0
      %529 = vmatprep.subr.mxu0 0.0
      %530 = vmatpush1.msra.mxu0 0.0
      %531 = vmatprep.subr.mxu0 0.0
      %532 = vmatpush1.msra.mxu0 0.0
      %533 = vmatprep.subr.mxu0 0.0
      %534 = vmatpush1.msra.mxu0 0.0
      %535 = vmatprep.subr.mxu0 0.0
      %536 = vmatpush1.msra.mxu0 0.0
      %537 = vmatprep.subr.mxu0 0.0
      %538 = vmatpush1.msra.mxu0 0.0
      %539 = vmatprep.mubr.f32.mxu0 0.0
      %540 = vmatmul.mubr.f32.gmra.mrb[0].mxu0 %v451
      %v541 = vpop.f32.mrb[0].mxu0
      %v542 = vadd.f32 %v473, %v541
      %v543 = vpop.f32.mrb[0].mxu0
      %544 = vdwg.mxu0
      %545 = vst.msk [vmem:[%s273] sm:$0xff] %vm283, %v542
      %p546 = scmp.lt.s32.totalorder %s18, 1
      %s547 = scalar_select %p546, %s18, 1
      %s548 = smul.addr %s547, 8
      %s549 = scalar_lea.vmem %s7, %s548
      // Predicated region
      $region49: #{tpu_custom_call.1} parent=47 // pred_check
        %p550 = pneg %p188
      $region50: #{tpu_custom_call.1} parent=47 // pred_check_branch
        %552 = sbr.rel (%p550) target = $region52
      $region51: #{tpu_custom_call.1} parent=47 // pred_region
        _
      $region52: #{tpu_custom_call.1} parent=47 // pred_fallthru
        _
    $region48: #{tpu_custom_call.1} parent=5 // pred_fallthru
      _
    %p553 = scmp.le.s32.totalorder 2, %s13
    // Predicated region
    $region53: #{tpu_custom_call.1} parent=5 // pred_check
      %p554 = pneg %p553
    $region54: #{tpu_custom_call.1} parent=5 // pred_check_branch
      %556 = sbr.rel (%p554) target = $region56
    $region55: #{tpu_custom_call.1} parent=5 // pred_region
      %s557 = ssub.s32 %s13, 2
      // Predicated region
      $region57: #{tpu_custom_call.1} parent=55 // pred_check
        %p558 = pneg %p194
      $region58: #{tpu_custom_call.1} parent=55 // pred_check_branch
        %560 = sbr.rel (%p558) target = $region60
      $region59: #{tpu_custom_call.1} parent=55 // pred_region
        %p561 = scmp.lt.s32.totalorder %s19, 1
        %s562 = scalar_select %p561, %s19, 1
        %s563 = smul.addr %s562, 8
        %s564 = scalar_lea.vmem %s7, %s563
      $region60: #{tpu_custom_call.1} parent=55 // pred_fallthru
        _
    $region56: #{tpu_custom_call.1} parent=5 // pred_fallthru
      _
  $region6: #{tpu_custom_call.1} parent=0 // loop_footer
    %s17 = sadd.s32 1, %s13
  $region7: #{tpu_custom_call.1} parent=0 // loop_footer_branch
    %12 = sbr.rel target = $region3
  $region8: #{tpu_custom_call.1} parent=0 // loop_exit
    _

</llo_original>
